<compile_context>
chip_gen: v7x
topology: tpu7x:2x2x1
jax: 0.10.0
libtpu: 0.0.40
codegen_flags: <defaults>
</compile_context>

<pallas_src>
import functools

import jax
import jax.numpy as jnp
from jax.experimental import pallas as pl
from jax.experimental.pallas import tpu as pltpu

BN_EPS = 1e-5


def _round_up(x, m):
    return (x + m - 1) // m * m


def _pick_tile(padded_dim, candidates):
    for c in candidates:
        if padded_dim % c == 0:
            return c
    return candidates[-1]


# ---------------- pass 1: batch statistics -> per-column (scale, bias) -------

def _stats_kernel(x_ref, gamma_ref, beta_ref, s_ref, b_ref, sum_ref, sq_ref,
                  *, inv_n):
    # grid = (Kp // tk, Mp // tm); M (batch reduction) axis is innermost.
    i = pl.program_id(1)

    @pl.when(i == 0)
    def _():
        sum_ref[...] = jnp.zeros_like(sum_ref)
        sq_ref[...] = jnp.zeros_like(sq_ref)

    x = x_ref[...].astype(jnp.float32)                       # (tm, tk)
    sum_ref[...] += jnp.sum(x, axis=0, keepdims=True)        # partial col sums
    sq_ref[...] += jnp.sum(x * x, axis=0, keepdims=True)

    @pl.when(i == pl.num_programs(1) - 1)
    def _():
        # TODO(synk): single-pass E[x^2]-E[x]^2 (in f32) can lose precision for
        # data with |mean| >> std; a shifted/two-pass form would need a second
        # read of x.  Fine for typical normalized inputs at 1e-3 tolerance.
        mean = sum_ref[...] * inv_n
        var = jnp.maximum(sq_ref[...] * inv_n - mean * mean, 0.0)
        s = gamma_ref[...] * jax.lax.rsqrt(var + BN_EPS)      # gamma / std
        s_ref[...] = s
        b_ref[...] = beta_ref[...] - mean * s                 # beta - mean*gamma/std


# ---------------- pass 2: tiled MXU matmul with on-the-fly BN scale ----------

def _matmul_kernel(x_ref, s_ref, w_ref, bias_ref, o_ref, y_ref, acc_ref, *, tk):
    # grid = (Mp//tm, Np//tn, Kp//tk); K (contraction) innermost,
    # x row-slab (tm, Kp) resident across the whole (j, k) sweep.
    j = pl.program_id(1)
    k = pl.program_id(2)

    @pl.when((j == 0) & (k == 0))
    def _():
        # Fold the BN scale into the resident activation slab exactly once per
        # M tile.  The additive BN term is hoisted out of the kernel entirely
        # (bias_row = (beta - mean*s) @ W, added at writeback).
        y_ref[...] = (x_ref[...].astype(jnp.float32)
                      * s_ref[...]).astype(y_ref.dtype)

    @pl.when(k == 0)
    def _():
        acc_ref[...] = jnp.zeros_like(acc_ref)

    ks = pl.multiple_of(k * tk, tk)
    acc_ref[...] += jnp.dot(y_ref[:, pl.ds(ks, tk)], w_ref[...],
                            preferred_element_type=jnp.float32)

    @pl.when(k == pl.num_programs(2) - 1)
    def _():
        o_ref[...] = (acc_ref[...] + bias_ref[...]).astype(o_ref.dtype)


def bn_linear(x, gamma, beta, w_t):
    """BatchNorm1d (training-mode batch stats) followed by a bias-free Linear.

    x:     (N, F_in)
    gamma: (F_in,)  BN weight
    beta:  (F_in,)  BN bias
    w_t:   (F_in, F_out) Linear weight, pre-transposed ONCE at init
           (PyTorch stores it as (F_out, F_in)).
    """
    n, f_in = x.shape
    f_out = w_t.shape[1]
    x_bytes = jnp.dtype(x.dtype).itemsize
    w_bytes = jnp.dtype(w_t.dtype).itemsize

    # ---- tile selection ---------------------------------------------------
    kp = _round_up(f_in, 128)
    tk = _pick_tile(kp, (512, 384, 256, 128))

    # x stays VMEM-resident as a (tm, kp) slab: 2 pipeline buffers + 1 folded
    # scratch copy.  Keep that under ~12 MiB so it fits every generation
    # (v7x: 32 MiB default scoped / 64 MiB physical VMEM).
    slab_budget = 12 * 1024 * 1024
    tm_cap = max(8, (slab_budget // (3 * kp * x_bytes)) // 8 * 8)
    tm = min(512, _round_up(n, 8), tm_cap)
    mp = _round_up(n, tm)

    # Output tile: keep the 256-wide MXU columns on v6e/v7x fed when F_out is
    # large enough; always lane-dense (>= 128).
    np128 = _round_up(f_out, 128)
    if np128 <= 128:
        tn = 128
    else:
        np256 = _round_up(f_out, 256)
        tn = 512 if np256 % 512 == 0 else 256
    npad = _round_up(f_out, tn)

    # ---- zero-pad to aligned shapes (no-ops when already aligned) ----------
    xp = jnp.pad(x, ((0, mp - n), (0, kp - f_in)))
    gp = jnp.pad(gamma.astype(jnp.float32), (0, kp - f_in)).reshape(1, kp)
    bp = jnp.pad(beta.astype(jnp.float32), (0, kp - f_in)).reshape(1, kp)
    wp = jnp.pad(w_t, ((0, kp - f_in), (0, npad - f_out)))

    # ---- pass 1: batch statistics folded into per-column (scale, bias) -----
    stats = functools.partial(_stats_kernel, inv_n=1.0 / n)
    s_row, b_row = pl.pallas_call(
        stats,
        out_shape=(jax.ShapeDtypeStruct((1, kp), jnp.float32),
                   jax.ShapeDtypeStruct((1, kp), jnp.float32)),
        grid=(kp // tk, mp // tm),
        in_specs=[
            pl.BlockSpec((tm, tk), lambda j, i: (i, j)),
            pl.BlockSpec((1, tk), lambda j, i: (0, j)),
            pl.BlockSpec((1, tk), lambda j, i: (0, j)),
        ],
        out_specs=(pl.BlockSpec((1, tk), lambda j, i: (0, j)),
                   pl.BlockSpec((1, tk), lambda j, i: (0, j))),
        scratch_shapes=[pltpu.VMEM((1, tk), jnp.float32),
                        pltpu.VMEM((1, tk), jnp.float32)],
        compiler_params=pltpu.CompilerParams(
            dimension_semantics=("parallel", "arbitrary")),
    )(xp, gp, bp)

    # Hoist the additive BN term out of the matmul k-loop:
    # (x*s + b) @ W == (x*s) @ W + (b @ W).  b @ W is a one-time (1,K)x(K,N)
    # matvec; its (1, tn) slice is added at the k==last writeback.
    bias_row = jnp.dot(b_row, wp, preferred_element_type=jnp.float32)

    # ---- pass 2: tiled, pipelined matmul ------------------------------------
    est_vmem = (3 * tm * kp * x_bytes          # 2 x buffers + folded scratch
                + 2 * tk * tn * w_bytes        # weight double-buffer
                + 2 * tm * tn * x_bytes        # output double-buffer
                + tm * tn * 4                  # f32 accumulator
                + 2 * kp * 4 + 4 * tn * 4)     # resident s_row / bias tiles
    vmem_limit = int(min(max(est_vmem * 1.3, 16 * 1024 * 1024),
                         48 * 1024 * 1024))

    mm = functools.partial(_matmul_kernel, tk=tk)
    out_p = pl.pallas_call(
        mm,
        out_shape=jax.ShapeDtypeStruct((mp, npad), x.dtype),
        grid=(mp // tm, npad // tn, kp // tk),
        in_specs=[
            pl.BlockSpec((tm, kp), lambda i, j, k: (i, 0)),   # x row slab, resident per i
            pl.BlockSpec((1, kp), lambda i, j, k: (0, 0)),    # BN scale, resident whole call
            pl.BlockSpec((tk, tn), lambda i, j, k: (k, j)),   # weight tile
            pl.BlockSpec((1, tn), lambda i, j, k: (0, j)),    # hoisted bias row slice
        ],
        out_specs=pl.BlockSpec((tm, tn), lambda i, j, k: (i, j)),
        scratch_shapes=[pltpu.VMEM((tm, kp), x.dtype),        # BN-folded x slab
                        pltpu.VMEM((tm, tn), jnp.float32)],   # f32 accumulator
        compiler_params=pltpu.CompilerParams(
            dimension_semantics=("parallel", "parallel", "arbitrary"),
            vmem_limit_bytes=vmem_limit),
    )(xp, s_row, wp, bias_row)

    return out_p[:n, :f_out]


def init_params(key, input_features, output_features):
    """Deterministic parameter init mirroring the PyTorch module's __init__."""
    # BatchNorm1d affine init: gamma = 1, beta = 0.
    gamma = jnp.ones((input_features,), jnp.float32)
    beta = jnp.zeros((input_features,), jnp.float32)
    # Linear weight init: U(-1/sqrt(fan_in), 1/sqrt(fan_in)), then /= (out/2).
    bound = 1.0 / jnp.sqrt(jnp.float32(input_features))
    w = jax.random.uniform(key, (output_features, input_features),
                           jnp.float32, minval=-bound, maxval=bound)
    w = w / (output_features / 2.0)
    return gamma, beta, w


def reference(x, gamma, beta, weight):
    """Pure-JAX reference for sanity checking (weight in PyTorch (out, in) layout)."""
    mean = jnp.mean(x, axis=0, keepdims=True)
    var = jnp.mean((x - mean) ** 2, axis=0, keepdims=True)
    y = (x - mean) / jnp.sqrt(var + BN_EPS) * gamma + beta
    return y @ weight.T


# TODO(synk): BatchNorm1d's running_mean/running_var buffer updates (a training-time
# side effect, not part of the forward output) are not reproduced.

if __name__ == "__main__":
    key = jax.random.PRNGKey(0)
    k_x, k_w = jax.random.split(key)

    batch, in_features, out_features = 8, 32, 16
    x = jax.random.normal(k_x, (batch, in_features), jnp.float32)
    gamma, beta, weight = init_params(k_w, in_features, out_features)

    # One-time layout prep: PyTorch (out, in) -> kernel-friendly (in, out).
    w_t = jnp.asarray(weight.T)

    out = jax.block_until_ready(bn_linear(x, gamma, beta, w_t))

    ref = reference(x, gamma, beta, weight)
    assert out.shape == (batch, out_features), out.shape
    assert jnp.allclose(out, ref, atol=1e-3, rtol=1e-3), \
        float(jnp.max(jnp.abs(out - ref)))

    print("KERNEL_OK")
</pallas_src>

<mosaic_0001>
module attributes {stable_mosaic.version = 11 : i64} {
  func.func @_stats_kernel(%arg0: i32, %arg1: i32, %arg2: memref<8x128xf32, #tpu.memory_space<vmem>>, %arg3: memref<1x128xf32, #tpu.memory_space<vmem>>, %arg4: memref<1x128xf32, #tpu.memory_space<vmem>>, %arg5: memref<1x128xf32, #tpu.memory_space<vmem>>, %arg6: memref<1x128xf32, #tpu.memory_space<vmem>>, %arg7: memref<1x128xf32, #tpu.memory_space<vmem>>, %arg8: memref<1x128xf32, #tpu.memory_space<vmem>>) attributes {dimension_semantics = [#tpu.dimension_semantics<parallel>, #tpu.dimension_semantics<arbitrary>], iteration_bounds = array<i64: 1, 1>, scalar_prefetch = 0 : i64, scratch_operands = 2 : i64, tpu.core_type = #tpu.core_type<tc>, window_params = [{transform_indices = @transform_0, window_bounds = array<i64: 8, 128>}, {transform_indices = @transform_1, window_bounds = array<i64: 1, 128>}, {transform_indices = @transform_2, window_bounds = array<i64: 1, 128>}, {transform_indices = @transform_3, window_bounds = array<i64: 1, 128>}, {transform_indices = @transform_4, window_bounds = array<i64: 1, 128>}]} {
    %c0_i32 = arith.constant 0 : i32
    %0 = arith.cmpi eq, %arg1, %c0_i32 : i32
    %1 = arith.extui %0 : i1 to i32
    %c0_i32_0 = arith.constant 0 : i32
    %2 = arith.cmpi ne, %1, %c0_i32_0 : i32
    scf.if %2 {
      %cst_13 = arith.constant 0.000000e+00 : f32
      %18 = vector.broadcast %cst_13 : f32 to vector<1x128xf32>
      %c0_14 = arith.constant 0 : index
      %c0_15 = arith.constant 0 : index
      %19 = vector.load %arg7[%c0_14, %c0_15] : memref<1x128xf32, #tpu.memory_space<vmem>>, vector<1x128xf32>
      tpu.vector_store %arg7[%c0_14, %c0_15], %18 {strides = array<i32>} : memref<1x128xf32, #tpu.memory_space<vmem>>, vector<1x128xf32>,
      %cst_16 = arith.constant 0.000000e+00 : f32
      %20 = vector.broadcast %cst_16 : f32 to vector<1x128xf32>
      %c0_17 = arith.constant 0 : index
      %c0_18 = arith.constant 0 : index
      %21 = vector.load %arg8[%c0_17, %c0_18] : memref<1x128xf32, #tpu.memory_space<vmem>>, vector<1x128xf32>
      tpu.vector_store %arg8[%c0_17, %c0_18], %20 {strides = array<i32>} : memref<1x128xf32, #tpu.memory_space<vmem>>, vector<1x128xf32>,
    } else {
    }
    %c0 = arith.constant 0 : index
    %c0_1 = arith.constant 0 : index
    %3 = vector.load %arg2[%c0, %c0_1] : memref<8x128xf32, #tpu.memory_space<vmem>>, vector<8x128xf32>
    %c0_2 = arith.constant 0 : index
    %c0_3 = arith.constant 0 : index
    %4 = vector.load %arg7[%c0_2, %c0_3] : memref<1x128xf32, #tpu.memory_space<vmem>>, vector<1x128xf32>
    %cst = arith.constant dense<0.000000e+00> : vector<128xf32>
    %5 = vector.multi_reduction <add>, %3, %cst [0] : vector<8x128xf32> to vector<128xf32>
    %6 = vector.shape_cast %5 : vector<128xf32> to vector<1x128xf32>
    %7 = arith.addf %4, %6 : vector<1x128xf32>
    %c0_4 = arith.constant 0 : index
    %c0_5 = arith.constant 0 : index
    %8 = vector.load %arg7[%c0_4, %c0_5] : memref<1x128xf32, #tpu.memory_space<vmem>>, vector<1x128xf32>
    tpu.vector_store %arg7[%c0_4, %c0_5], %7 {strides = array<i32>} : memref<1x128xf32, #tpu.memory_space<vmem>>, vector<1x128xf32>,
    %c0_6 = arith.constant 0 : index
    %c0_7 = arith.constant 0 : index
    %9 = vector.load %arg8[%c0_6, %c0_7] : memref<1x128xf32, #tpu.memory_space<vmem>>, vector<1x128xf32>
    %10 = arith.mulf %3, %3 : vector<8x128xf32>
    %cst_8 = arith.constant dense<0.000000e+00> : vector<128xf32>
    %11 = vector.multi_reduction <add>, %10, %cst_8 [0] : vector<8x128xf32> to vector<128xf32>
    %12 = vector.shape_cast %11 : vector<128xf32> to vector<1x128xf32>
    %13 = arith.addf %9, %12 : vector<1x128xf32>
    %c0_9 = arith.constant 0 : index
    %c0_10 = arith.constant 0 : index
    %14 = vector.load %arg8[%c0_9, %c0_10] : memref<1x128xf32, #tpu.memory_space<vmem>>, vector<1x128xf32>
    tpu.vector_store %arg8[%c0_9, %c0_10], %13 {strides = array<i32>} : memref<1x128xf32, #tpu.memory_space<vmem>>, vector<1x128xf32>,
    %c0_i32_11 = arith.constant 0 : i32
    %15 = arith.cmpi eq, %arg1, %c0_i32_11 : i32
    %16 = arith.extui %15 : i1 to i32
    %c0_i32_12 = arith.constant 0 : i32
    %17 = arith.cmpi ne, %16, %c0_i32_12 : i32
    scf.if %17 {
      %c0_13 = arith.constant 0 : index
      %c0_14 = arith.constant 0 : index
      %18 = vector.load %arg7[%c0_13, %c0_14] : memref<1x128xf32, #tpu.memory_space<vmem>>, vector<1x128xf32>
      %cst_15 = arith.constant 1.250000e-01 : f32
      %19 = vector.broadcast %cst_15 : f32 to vector<1x128xf32>
      %20 = arith.mulf %18, %19 : vector<1x128xf32>
      %c0_16 = arith.constant 0 : index
      %c0_17 = arith.constant 0 : index
      %21 = vector.load %arg8[%c0_16, %c0_17] : memref<1x128xf32, #tpu.memory_space<vmem>>, vector<1x128xf32>
      %cst_18 = arith.constant 1.250000e-01 : f32
      %22 = vector.broadcast %cst_18 : f32 to vector<1x128xf32>
      %23 = arith.mulf %21, %22 : vector<1x128xf32>
      %24 = arith.mulf %20, %20 : vector<1x128xf32>
      %25 = arith.subf %23, %24 : vector<1x128xf32>
      %cst_19 = arith.constant 0.000000e+00 : f32
      %26 = vector.broadcast %cst_19 : f32 to vector<1x128xf32>
      %27 = arith.maximumf %25, %26 : vector<1x128xf32>
      %c0_20 = arith.constant 0 : index
      %c0_21 = arith.constant 0 : index
      %28 = vector.load %arg3[%c0_20, %c0_21] : memref<1x128xf32, #tpu.memory_space<vmem>>, vector<1x128xf32>
      %cst_22 = arith.constant 9.99999974E-6 : f32
      %29 = vector.broadcast %cst_22 : f32 to vector<1x128xf32>
      %30 = arith.addf %27, %29 : vector<1x128xf32>
      %31 = math.rsqrt %30 : vector<1x128xf32>
      %32 = arith.mulf %28, %31 : vector<1x128xf32>
      %c0_23 = arith.constant 0 : index
      %c0_24 = arith.constant 0 : index
      %33 = vector.load %arg5[%c0_23, %c0_24] : memref<1x128xf32, #tpu.memory_space<vmem>>, vector<1x128xf32>
      tpu.vector_store %arg5[%c0_23, %c0_24], %32 {strides = array<i32>} : memref<1x128xf32, #tpu.memory_space<vmem>>, vector<1x128xf32>,
      %c0_25 = arith.constant 0 : index
      %c0_26 = arith.constant 0 : index
      %34 = vector.load %arg4[%c0_25, %c0_26] : memref<1x128xf32, #tpu.memory_space<vmem>>, vector<1x128xf32>
      %35 = arith.mulf %20, %32 : vector<1x128xf32>
      %36 = arith.subf %34, %35 : vector<1x128xf32>
      %c0_27 = arith.constant 0 : index
      %c0_28 = arith.constant 0 : index
      %37 = vector.load %arg6[%c0_27, %c0_28] : memref<1x128xf32, #tpu.memory_space<vmem>>, vector<1x128xf32>
      tpu.vector_store %arg6[%c0_27, %c0_28], %36 {strides = array<i32>} : memref<1x128xf32, #tpu.memory_space<vmem>>, vector<1x128xf32>,
    } else {
    }
    return
  }
  func.func @transform_0(%arg0: i32, %arg1: i32) -> (i32, i32) {
    %c0_i32 = arith.constant 0 : i32
    return %arg1, %arg0 : i32, i32
  }
  func.func @transform_1(%arg0: i32, %arg1: i32) -> (i32, i32) {
    %c0_i32 = arith.constant 0 : i32
    %c0_i32_0 = arith.constant 0 : i32
    return %c0_i32, %arg0 : i32, i32
  }
  func.func @transform_2(%arg0: i32, %arg1: i32) -> (i32, i32) {
    %c0_i32 = arith.constant 0 : i32
    %c0_i32_0 = arith.constant 0 : i32
    return %c0_i32, %arg0 : i32, i32
  }
  func.func @transform_3(%arg0: i32, %arg1: i32) -> (i32, i32) {
    %c0_i32 = arith.constant 0 : i32
    %c0_i32_0 = arith.constant 0 : i32
    return %c0_i32, %arg0 : i32, i32
  }
  func.func @transform_4(%arg0: i32, %arg1: i32) -> (i32, i32) {
    %c0_i32 = arith.constant 0 : i32
    %c0_i32_0 = arith.constant 0 : i32
    return %c0_i32, %arg0 : i32, i32
  }
}

</mosaic_0001>

<llo_original>
// kernel: tpu_custom_call.1
$region0: #{tpu_custom_call.1}
  #allocation0 [shape = 'u32[]', space=smem, size = 0x4, offset = 0x4, fixed_abs, tag = 'smem constant byte address 0x4 - core index']
  #allocation1 [shape = 'u32[144,128]{1,0:T(1,128)}', space=vmem, size = 0x12000, scoped, tag = 'internal scratch']
  #allocation2 [shape = 'f32[1,128]{1,0:T(1,128)}', space=vmem, size = 0x200, scoped, tag = 'scratch operand']
  #allocation3 [shape = 'f32[1,128]{1,0:T(1,128)}', space=vmem, size = 0x200, scoped, tag = 'scratch operand']
  %s0 = inlined_call_operand.hbm [shape: f32[8,128], index: 0, kind: input, shape index: {}]
  %s1 = inlined_call_operand.vmem [shape: f32[1,128], index: 1, kind: input, shape index: {}]
  %s2 = inlined_call_operand.vmem [shape: f32[1,128], index: 2, kind: input, shape index: {}]
  %s3 = inlined_call_operand.hbm [shape: f32[1,128], index: 3, kind: output, shape index: {0}]
  %s4 = inlined_call_operand.hbm [shape: f32[1,128], index: 4, kind: output, shape index: {1}]
  %5 = xla_tuple %s3, %s4
  %s6 = sld [smem:[#allocation0]]
  $region42: #{tpu_custom_call.1} parent=0
    _
  %s8 = ssub.s32 1, %s6
  %s9 = scalar_select 0, %s8, %s6
  $region1: #{tpu_custom_call.1} parent=0
    #allocation4 [shape = 'u8[4096]{0}', space=vmem, size = 0x1000, scoped, tag = 'input window, operand 0, single buffered']
    #allocation5 [shape = 's32[1]{0}', space=sflag, size = 0x4, scoped, tag = 'scoped memory for tpu_custom_call.1']
    #allocation6 [shape = 's32[1]{0}', space=sflag, size = 0x4, scoped, tag = 'scoped memory for tpu_custom_call.1']
    #allocation7 [shape = 'u8[512]{0}', space=vmem, size = 0x400, scoped, tag = 'output window, operand 0, single buffered']
    #allocation8 [shape = 'u8[512]{0}', space=vmem, size = 0x400, scoped, tag = 'output window, operand 1, single buffered']
    #allocation9 [shape = 's32[1]{0}', space=sflag, size = 0x4, scoped, tag = 'scoped memory for tpu_custom_call.1']
    %10 = vsyncpa [#allocation5], 0
    %11 = vsyncpa [#allocation6], 0
    %12 = vsyncpa [#allocation9], 0
    // Predicated region
    $region2: #{tpu_custom_call.1} parent=1 // pred_check
      _
    $region3: #{tpu_custom_call.1} parent=1 // pred_check_branch
      %14 = sbr.rel (0) target = $region5
    $region4: #{tpu_custom_call.1} parent=1 // pred_region
      %s16 = ssub.s32 128, 128
      %17 = vsyncadd [#allocation5], %s16
      %s19 = sshll.u32 [#allocation4], 4
      %s20 = int_to_ptr.vmem [resolvable:$true] %s19
      %22 = dma.hbm_to_vmem [thread:$0]  %s0, 128, %s20, [#allocation5]
    $region5: #{tpu_custom_call.1} parent=1 // pred_fallthru
      _
    // Predicated region
    $region6: #{tpu_custom_call.1} parent=1 // pred_check
      _
    $region7: #{tpu_custom_call.1} parent=1 // pred_check_branch
      %24 = sbr.rel (0) target = $region9
    $region8: #{tpu_custom_call.1} parent=1 // pred_region
      _
    $region9: #{tpu_custom_call.1} parent=1 // pred_fallthru
      _
    // Predicated region
    $region10: #{tpu_custom_call.1} parent=1 // pred_check
      _
    $region11: #{tpu_custom_call.1} parent=1 // pred_check_branch
      %26 = sbr.rel (0) target = $region13
    $region12: #{tpu_custom_call.1} parent=1 // pred_region
      _
    $region13: #{tpu_custom_call.1} parent=1 // pred_fallthru
      _
    // Predicated region
    $region14: #{tpu_custom_call.1} parent=1 // pred_check
      _
    $region15: #{tpu_custom_call.1} parent=1 // pred_check_branch
      %28 = sbr.rel (0) target = $region17
    $region16: #{tpu_custom_call.1} parent=1 // pred_region
      %29 = dma.done [#allocation5], 128
    $region17: #{tpu_custom_call.1} parent=1 // pred_fallthru
      _
    %p30 = scmp.eq.s32.totalorder 0, 0
    // Predicated region
    $region18: #{tpu_custom_call.1} parent=1 // pred_check
      %p31 = pneg %p30
    $region19: #{tpu_custom_call.1} parent=1 // pred_check_branch
      %33 = sbr.rel (%p31) target = $region21
    $region20: #{tpu_custom_call.1} parent=1 // pred_region
      %34 = vst [vmem:[#allocation2] sm:$0x1] 0.0
      %35 = vst [vmem:[#allocation3] sm:$0x1] 0.0
    $region21: #{tpu_custom_call.1} parent=1 // pred_fallthru
      _
    %v36 = vld [vmem:[#allocation4] sm:$0xff]
    %v37 = vld [vmem:[#allocation2] sm:$0x1]
    %v38 = vrot.slane %v36, 4
    %v39 = vadd.f32 %v36, %v38
    %v40 = vrot.slane %v39, 2
    %v41 = vadd.f32 %v39, %v40
    %v42 = vrot.slane %v41, 1
    %v43 = vadd.f32 %v41, %v42
    %v44 = vadd.f32 %v37, %v43
    %45 = vst [vmem:[#allocation2] sm:$0x1] %v44
    %v46 = vld [vmem:[#allocation3] sm:$0x1]
    %v47 = vmul.f32 %v36, %v36
    %v48 = vrot.slane %v47, 4
    %v49 = vadd.f32 %v47, %v48
    %v50 = vrot.slane %v49, 2
    %v51 = vadd.f32 %v49, %v50
    %v52 = vrot.slane %v51, 1
    %v53 = vadd.f32 %v51, %v52
    %v54 = vadd.f32 %v46, %v53
    %55 = vst [vmem:[#allocation3] sm:$0x1] %v54
    // Predicated region
    $region22: #{tpu_custom_call.1} parent=1 // pred_check
      %p56 = pneg %p30
    $region23: #{tpu_custom_call.1} parent=1 // pred_check_branch
      %58 = sbr.rel (%p56) target = $region25
    $region24: #{tpu_custom_call.1} parent=1 // pred_region
      %v59 = vld [vmem:[#allocation2] sm:$0x1]
      %v60 = vmul.f32 %v59, 0.125
      %v61 = vld [vmem:[#allocation3] sm:$0x1]
      %v62 = vmul.f32 %v61, 0.125
      %v63 = vmul.f32 %v60, %v60
      %v64 = vsub.f32 %v62, %v63
      %v65 = vmax.f32 %v64, 0.0
      %v66 = vld [vmem:[%s1] sm:$0x1]
      %v67 = vadd.f32 %v65, 1e-05
      %v68 = vrsqrt.pop %v67
      %v69 = vmul.f32 %v66, %v68
      %70 = vst [vmem:[#allocation7] sm:$0x1] %v69
      %v71 = vld [vmem:[%s2] sm:$0x1]
      %v72 = vmul.f32 %v60, %v69
      %v73 = vsub.f32 %v71, %v72
      %74 = vst [vmem:[#allocation8] sm:$0x1] %v73
    $region25: #{tpu_custom_call.1} parent=1 // pred_fallthru
      _
    // Predicated region
    $region26: #{tpu_custom_call.1} parent=1 // pred_check
      _
    $region27: #{tpu_custom_call.1} parent=1 // pred_check_branch
      %76 = sbr.rel (0) target = $region29
    $region28: #{tpu_custom_call.1} parent=1 // pred_region
      %s78 = ssub.s32 16, 16
      %79 = vsyncadd [#allocation6], %s78
      %s81 = sshll.u32 [#allocation7], 4
      %s82 = int_to_ptr.vmem [resolvable:$true] %s81
      %84 = dma.vmem_to_hbm [thread:$0]  %s82, 16, %s3, [#allocation6]
    $region29: #{tpu_custom_call.1} parent=1 // pred_fallthru
      _
    // Predicated region
    $region30: #{tpu_custom_call.1} parent=1 // pred_check
      _
    $region31: #{tpu_custom_call.1} parent=1 // pred_check_branch
      %86 = sbr.rel (0) target = $region33
    $region32: #{tpu_custom_call.1} parent=1 // pred_region
      %s88 = ssub.s32 16, 16
      %89 = vsyncadd [#allocation9], %s88
      %s91 = sshll.u32 [#allocation8], 4
      %s92 = int_to_ptr.vmem [resolvable:$true] %s91
      %94 = dma.vmem_to_hbm [thread:$0]  %s92, 16, %s4, [#allocation9]
    $region33: #{tpu_custom_call.1} parent=1 // pred_fallthru
      _
    // Predicated region
    $region34: #{tpu_custom_call.1} parent=1 // pred_check
      _
    $region35: #{tpu_custom_call.1} parent=1 // pred_check_branch
      %96 = sbr.rel (0) target = $region37
    $region36: #{tpu_custom_call.1} parent=1 // pred_region
      %97 = dma.done [#allocation6], 16
    $region37: #{tpu_custom_call.1} parent=1 // pred_fallthru
      _
    // Predicated region
    $region38: #{tpu_custom_call.1} parent=1 // pred_check
      _
    $region39: #{tpu_custom_call.1} parent=1 // pred_check_branch
      %99 = sbr.rel (0) target = $region41
    $region40: #{tpu_custom_call.1} parent=1 // pred_region
      %100 = dma.done [#allocation9], 16
    $region41: #{tpu_custom_call.1} parent=1 // pred_fallthru
      _
    %101 = vsyncpa [#allocation5], 1
    %102 = vsyncpa [#allocation6], 1
    %103 = vsyncpa [#allocation9], 1

</llo_original>
